<compile_context>
chip_gen: v7x
topology: tpu7x:2x2x1
jax: 0.10.0
libtpu: 0.0.40
codegen_flags: <defaults>
</compile_context>

<pallas_src>
import functools

import jax
import jax.numpy as jnp
from jax import lax
from jax.experimental import pallas as pl
from jax.experimental.pallas import tpu as pltpu


def _round_up(v, m):
    return -(-v // m) * m


# ----------------------------------------------------------------------------
# Hardware probing (cached once, with conservative fallbacks)
# ----------------------------------------------------------------------------
@functools.lru_cache(maxsize=1)
def _tpu_hw_info():
    """Returns (vmem_capacity_bytes, tensorcores_per_device)."""
    kind = ""
    try:
        kind = jax.devices()[0].device_kind.lower()
    except Exception:
        pass
    vmem_cap = 0
    try:
        info = pltpu.get_tpu_info()
        vmem_cap = int(getattr(info, "vmem_capacity_bytes", 0) or 0)
    except Exception:
        vmem_cap = 0
    is_v7 = "7" in kind
    if vmem_cap <= 0:
        # v7x: 64 MiB per TensorCore; v4/v5e/v5p/v6e: 128 MiB.
        vmem_cap = (64 << 20) if is_v7 else (128 << 20)
    # 2 TensorCores per device: v7x and the megacore parts (v4 / v5p).
    two_tc = is_v7 or ("v4" in kind) or ("v5p" in kind)
    return vmem_cap, (2 if two_tc else 1)


def _vmem_limit_bytes(vmem_cap):
    # v7x (64 MiB physical per TC): cap ~50 MiB, leave headroom for
    # compiler-internal scratch.  128 MiB parts: ~100 MiB (v5e's 16 MiB default
    # scoped limit makes the explicit raise mandatory there).
    return (50 << 20) if vmem_cap <= (64 << 20) else (100 << 20)


# ----------------------------------------------------------------------------
# Pallas kernel:  W(Cout,K) @ X(tm,K)^T  -> f32 (Cout,tm)  + bias -> LayerNorm
# ----------------------------------------------------------------------------
def _merge_ln_kernel(x_ref, w_ref, b_ref, g_ref, beta_ref, o_ref, *, eps):
    # MXU matmul in the "NT" form (contract both minor dims), f32 accumulation.
    # Result is channels-first: (Cout, tm) with tokens on the lane axis, so the
    # store is lane-dense regardless of Cout and no output transpose is needed.
    y = lax.dot_general(
        w_ref[...], x_ref[0],
        dimension_numbers=(((1,), (1,)), ((), ())),
        preferred_element_type=jnp.float32)            # (Cout, tm)
    y = y + b_ref[...]                                 # (Cout, 1) broadcast over tokens

    # LayerNorm over the channel (sublane) axis — biased variance, like PyTorch.
    mean = jnp.mean(y, axis=0, keepdims=True)          # (1, tm)
    centered = y - mean
    var = jnp.mean(centered * centered, axis=0, keepdims=True)
    out = centered * lax.rsqrt(var + eps) * g_ref[...] + beta_ref[...]

    o_ref[0] = out.astype(o_ref.dtype)


# ----------------------------------------------------------------------------
# Tiling / VMEM budget
# ----------------------------------------------------------------------------
def _pick_token_tile(ntok, nbatch, k, cout, tok_isz, out_isz, resident_bytes,
                     vmem_limit, tm_max, num_tc):
    """Largest token tile (multiple of 128) whose double-buffered in/out tiles fit."""
    if ntok <= 256:
        return int(ntok)                                   # one full block per batch entry

    per_row = 2 * k * tok_isz + 2 * cout * out_isz         # 2-deep input + output rows
    budget = max(vmem_limit - resident_bytes - (4 << 20), 256 * per_row)
    tm = min(tm_max, budget // max(per_row, 1))
    # Multiple of 128: lane-dense output stores and bf16 sublane packing on input.
    tm = max(128, (int(tm) // 128) * 128)

    if num_tc > 1:
        nblk = lambda t: nbatch * (-(-ntok // t))
        if nblk(tm) < num_tc:                              # give every TensorCore a block
            tm = max(128, _round_up(-(-ntok // num_tc), 128))
        if nblk(tm) % num_tc:                              # balance work across cores
            for cand in range(int(tm), 127, -128):
                if nblk(cand) % num_tc == 0:
                    tm = cand
                    break

    return int(min(tm, ntok))


# ----------------------------------------------------------------------------
# Fused token matmul + LayerNorm (channels-first output)
# ----------------------------------------------------------------------------
def _fused_merge_layernorm(tokens, w, b, gamma, beta, *, eps, out_dtype):
    """tokens: (B, N, K);  w: (Cout, K);  b/gamma/beta: (Cout,).  -> (B, Cout, N)."""
    nb, ntok, k = tokens.shape
    cout = w.shape[0]

    vmem_cap, num_tc = _tpu_hw_info()
    vmem_limit = _vmem_limit_bytes(vmem_cap)
    tm_max = 1024 if vmem_cap <= (64 << 20) else 4096

    # Resident operands: weight + the three (Cout,1) vectors.  Their index_map is
    # constant so the pipeline only fetches them once; we still budget for the
    # (default) two buffers each to stay conservative.
    resident = 2 * (w.size * w.dtype.itemsize + 3 * cout * 4) + (1 << 20)

    tm = _pick_token_tile(ntok, nb, k, cout, tokens.dtype.itemsize,
                          jnp.dtype(out_dtype).itemsize, resident,
                          vmem_limit, tm_max, num_tc)
    grid = (nb, pl.cdiv(ntok, tm))

    b2 = b.reshape(cout, 1).astype(jnp.float32)
    g2 = gamma.reshape(cout, 1).astype(jnp.float32)
    be2 = beta.reshape(cout, 1).astype(jnp.float32)

    def const_spec(shape):
        return pl.BlockSpec(shape, lambda bi, ti: (0, 0))

    return pl.pallas_call(
        functools.partial(_merge_ln_kernel, eps=eps),
        out_shape=jax.ShapeDtypeStruct((nb, cout, ntok), out_dtype),
        grid_spec=pltpu.PrefetchScalarGridSpec(
            num_scalar_prefetch=0,
            grid=grid,
            in_specs=[
                pl.BlockSpec((1, tm, k), lambda bi, ti: (bi, ti, 0)),   # token tile
                const_spec((cout, k)),                                  # conv weight (resident)
                const_spec((cout, 1)),                                  # conv bias
                const_spec((cout, 1)),                                  # LN gamma
                const_spec((cout, 1)),                                  # LN beta
            ],
            out_specs=pl.BlockSpec((1, cout, tm), lambda bi, ti: (bi, 0, ti)),
        ),
        compiler_params=pltpu.CompilerParams(
            dimension_semantics=("parallel", "parallel"),
            vmem_limit_bytes=int(vmem_limit)),
    )(tokens, w, b2, g2, be2)


# ----------------------------------------------------------------------------
# PatchMerging_block forward (NCDHW in, NCDHW out)
# ----------------------------------------------------------------------------
def patch_merging_forward(x, conv_w, conv_b, ln_w, ln_b, *, eps=1e-5,
                          compute_dtype=jnp.bfloat16, out_dtype=None):
    """
    x      : (B, C, D, H, W)
    conv_w : (2C, C, 2, 2, 2)   Conv3d weight (OIDHW, PyTorch layout)
    conv_b : (2C,)
    ln_w   : (2C,)  LayerNorm gamma
    ln_b   : (2C,)  LayerNorm beta
    returns: (B, 2C, ceil(D/2), ceil(H/2), ceil(W/2)) in `out_dtype`
             (defaults to the bf16 compute dtype to halve writeback bytes).
    """
    if out_dtype is None:
        out_dtype = compute_dtype
    b, c, d, h, w = x.shape
    cout = conv_w.shape[0]

    # Cast *before* the patch gather so the shuffle below moves bf16 bytes.
    x = x.astype(compute_dtype)
    if (d % 2) or (h % 2) or (w % 2):
        # (matches nnf.pad(x, (0, w%2, 0, h%2, 0, d%2))); XLA fuses this pad into
        # the gather transpose below, it is not a standalone HBM pass.
        x = jnp.pad(x, ((0, 0), (0, 0), (0, d % 2), (0, h % 2), (0, w % 2)))
        d, h, w = x.shape[2:]
    do, ho, wo = d // 2, h // 2, w // 2
    ntok = do * ho * wo

    # Gather non-overlapping 2x2x2 patches -> (B, Ntok, K=C*8).  K is ordered
    # (c, kd, kh, kw) so the Conv3d weight flattens with NO transpose.
    # TODO(synk): last remaining full-HBM shuffle; see header note for why the
    # fully-fused stride-2 tap DMA version is deferred (lane deinterleave of W).
    xp = x.reshape(b, c, do, 2, ho, 2, wo, 2)
    xp = jnp.transpose(xp, (0, 2, 4, 6, 1, 3, 5, 7))       # (B,Do,Ho,Wo,C,2,2,2)
    tokens = xp.reshape(b, ntok, c * 8)

    # (Cout, C, 2, 2, 2) -> (Cout, K); flattening order matches the tokens.
    w_mat = conv_w.reshape(cout, c * 8).astype(compute_dtype)

    out = _fused_merge_layernorm(tokens, w_mat, conv_b, ln_w, ln_b,
                                 eps=eps, out_dtype=out_dtype)   # (B, Cout, Ntok)

    # Channels-first comes straight out of the kernel: this reshape is
    # metadata-only (no second HBM shuffle back to NCDHW).
    return out.reshape(b, cout, do, ho, wo)


# ----------------------------------------------------------------------------
# Pure-JAX reference (f32, for verification)
# ----------------------------------------------------------------------------
def patch_merging_reference(x, conv_w, conv_b, ln_w, ln_b, *, eps=1e-5):
    b, c, d, h, w = x.shape
    if (d % 2) or (h % 2) or (w % 2):
        x = jnp.pad(x, ((0, 0), (0, 0), (0, d % 2), (0, h % 2), (0, w % 2)))
    y = lax.conv_general_dilated(
        x, conv_w, window_strides=(2, 2, 2), padding="VALID",
        dimension_numbers=("NCDHW", "OIDHW", "NCDHW"))
    y = y + conv_b.reshape(1, -1, 1, 1, 1)
    yc = jnp.transpose(y, (0, 2, 3, 4, 1))                  # b d h w c
    mean = jnp.mean(yc, axis=-1, keepdims=True)
    var = jnp.mean((yc - mean) ** 2, axis=-1, keepdims=True)
    yn = (yc - mean) * lax.rsqrt(var + eps)
    yn = yn * ln_w + ln_b
    return jnp.transpose(yn, (0, 4, 1, 2, 3))


if __name__ == "__main__":
    key = jax.random.PRNGKey(0)
    k_x, k_w, k_b, k_g, k_beta, k_x2 = jax.random.split(key, 6)

    B, C, D, H, W = 2, 4, 8, 8, 8          # embed_dim = 4 -> out channels = 8
    Cout = 2 * C

    x = jax.random.normal(k_x, (B, C, D, H, W), dtype=jnp.float32)

    # deterministic synthetic parameters (Conv3d + LayerNorm shapes from __init__)
    fan_in = C * 2 * 2 * 2
    bound = 1.0 / (fan_in ** 0.5)
    conv_w = jax.random.uniform(k_w, (Cout, C, 2, 2, 2), jnp.float32, -bound, bound)
    conv_b = jax.random.uniform(k_b, (Cout,), jnp.float32, -bound, bound)
    ln_w = jnp.ones((Cout,), jnp.float32) + 0.1 * jax.random.normal(k_g, (Cout,))
    ln_b = 0.1 * jax.random.normal(k_beta, (Cout,))

    out = jax.block_until_ready(
        patch_merging_forward(x, conv_w, conv_b, ln_w, ln_b))
    ref = patch_merging_reference(x, conv_w, conv_b, ln_w, ln_b)
    assert out.shape == (B, Cout, D // 2, H // 2, W // 2), out.shape
    err = float(jnp.max(jnp.abs(out.astype(jnp.float32) - ref)))
    # bf16 tokens/weights on the MXU + bf16 writeback -> bf16-appropriate tolerance
    assert jnp.allclose(out.astype(jnp.float32), ref, rtol=4e-2, atol=4e-2), err

    # odd spatial dims: exercises the pad path and non-power-of-two token counts
    x2 = jax.random.normal(k_x2, (B, C, 7, 6, 5), dtype=jnp.float32)
    out2 = jax.block_until_ready(
        patch_merging_forward(x2, conv_w, conv_b, ln_w, ln_b))
    ref2 = patch_merging_reference(x2, conv_w, conv_b, ln_w, ln_b)
    assert out2.shape == (B, Cout, 4, 3, 3), out2.shape
    err2 = float(jnp.max(jnp.abs(out2.astype(jnp.float32) - ref2)))
    assert jnp.allclose(out2.astype(jnp.float32), ref2, rtol=4e-2, atol=4e-2), err2

    print("KERNEL_OK")
</pallas_src>

<mosaic_0001>
module attributes {stable_mosaic.version = 11 : i64} {
  func.func @_merge_ln_kernel(%arg0: i32, %arg1: i32, %arg2: memref<1x64x32xbf16, #tpu.memory_space<vmem>>, %arg3: memref<8x32xbf16, #tpu.memory_space<vmem>>, %arg4: memref<8x1xf32, #tpu.memory_space<vmem>>, %arg5: memref<8x1xf32, #tpu.memory_space<vmem>>, %arg6: memref<8x1xf32, #tpu.memory_space<vmem>>, %arg7: memref<1x8x64xbf16, #tpu.memory_space<vmem>>) attributes {dimension_semantics = [#tpu.dimension_semantics<parallel>, #tpu.dimension_semantics<parallel>], iteration_bounds = array<i64: 2, 1>, scalar_prefetch = 0 : i64, scratch_operands = 0 : i64, tpu.core_type = #tpu.core_type<tc>, window_params = [{transform_indices = @transform_0, window_bounds = array<i64: 1, 64, 32>}, {pipeline_mode = #tpu.pipeline_mode<synchronous>, transform_indices = @transform_1, window_bounds = array<i64: 8, 32>}, {pipeline_mode = #tpu.pipeline_mode<synchronous>, transform_indices = @transform_2, window_bounds = array<i64: 8, 1>}, {pipeline_mode = #tpu.pipeline_mode<synchronous>, transform_indices = @transform_3, window_bounds = array<i64: 8, 1>}, {pipeline_mode = #tpu.pipeline_mode<synchronous>, transform_indices = @transform_4, window_bounds = array<i64: 8, 1>}, {transform_indices = @transform_5, window_bounds = array<i64: 1, 8, 64>}]} {
    %c0 = arith.constant 0 : index
    %c0_0 = arith.constant 0 : index
    %0 = vector.load %arg3[%c0, %c0_0] : memref<8x32xbf16, #tpu.memory_space<vmem>>, vector<8x32xbf16>
    %c0_1 = arith.constant 0 : index
    %c0_2 = arith.constant 0 : index
    %c0_3 = arith.constant 0 : index
    %1 = vector.load %arg2[%c0_1, %c0_2, %c0_3] : memref<1x64x32xbf16, #tpu.memory_space<vmem>>, vector<1x64x32xbf16>
    %2 = vector.shape_cast %1 : vector<1x64x32xbf16> to vector<64x32xbf16>
    %cst = arith.constant dense<0.000000e+00> : vector<8x64xf32>
    %3 = tpu.matmul %0, %2, %cst {dimension_numbers = #tpu.dot_dimension_numbers<[1], [1], [0], [0], [0, 0, 1, 0], [], []>} : vector<8x32xbf16>, vector<64x32xbf16>, vector<8x64xf32> -> vector<8x64xf32>
    %c0_4 = arith.constant 0 : index
    %c0_5 = arith.constant 0 : index
    %4 = vector.load %arg4[%c0_4, %c0_5] : memref<8x1xf32, #tpu.memory_space<vmem>>, vector<8x1xf32>
    %5 = vector.broadcast %4 : vector<8x1xf32> to vector<8x64xf32>
    %6 = arith.addf %3, %5 : vector<8x64xf32>
    %cst_6 = arith.constant dense<0.000000e+00> : vector<64xf32>
    %7 = vector.multi_reduction <add>, %6, %cst_6 [0] : vector<8x64xf32> to vector<64xf32>
    %8 = vector.shape_cast %7 : vector<64xf32> to vector<1x64xf32>
    %cst_7 = arith.constant 8.000000e+00 : f32
    %9 = vector.broadcast %cst_7 : f32 to vector<1x64xf32>
    %10 = arith.divf %8, %9 : vector<1x64xf32>
    %11 = vector.broadcast %10 : vector<1x64xf32> to vector<8x64xf32>
    %12 = arith.subf %6, %11 : vector<8x64xf32>
    %13 = arith.mulf %12, %12 : vector<8x64xf32>
    %cst_8 = arith.constant dense<0.000000e+00> : vector<64xf32>
    %14 = vector.multi_reduction <add>, %13, %cst_8 [0] : vector<8x64xf32> to vector<64xf32>
    %15 = vector.shape_cast %14 : vector<64xf32> to vector<1x64xf32>
    %cst_9 = arith.constant 8.000000e+00 : f32
    %16 = vector.broadcast %cst_9 : f32 to vector<1x64xf32>
    %17 = arith.divf %15, %16 : vector<1x64xf32>
    %cst_10 = arith.constant 9.99999974E-6 : f32
    %18 = vector.broadcast %cst_10 : f32 to vector<1x64xf32>
    %19 = arith.addf %17, %18 : vector<1x64xf32>
    %20 = math.rsqrt %19 : vector<1x64xf32>
    %21 = vector.broadcast %20 : vector<1x64xf32> to vector<8x64xf32>
    %22 = arith.mulf %12, %21 : vector<8x64xf32>
    %c0_11 = arith.constant 0 : index
    %c0_12 = arith.constant 0 : index
    %23 = vector.load %arg5[%c0_11, %c0_12] : memref<8x1xf32, #tpu.memory_space<vmem>>, vector<8x1xf32>
    %24 = vector.broadcast %23 : vector<8x1xf32> to vector<8x64xf32>
    %25 = arith.mulf %22, %24 : vector<8x64xf32>
    %c0_13 = arith.constant 0 : index
    %c0_14 = arith.constant 0 : index
    %26 = vector.load %arg6[%c0_13, %c0_14] : memref<8x1xf32, #tpu.memory_space<vmem>>, vector<8x1xf32>
    %27 = vector.broadcast %26 : vector<8x1xf32> to vector<8x64xf32>
    %28 = arith.addf %25, %27 : vector<8x64xf32>
    %29 = arith.truncf %28 : vector<8x64xf32> to vector<8x64xbf16>
    %c0_15 = arith.constant 0 : index
    %c0_16 = arith.constant 0 : index
    %c0_17 = arith.constant 0 : index
    %30 = vector.load %arg7[%c0_15, %c0_16, %c0_17] : memref<1x8x64xbf16, #tpu.memory_space<vmem>>, vector<1x8x64xbf16>
    %31 = vector.shape_cast %30 : vector<1x8x64xbf16> to vector<8x64xbf16>
    %32 = vector.shape_cast %29 : vector<8x64xbf16> to vector<1x8x64xbf16>
    tpu.vector_store %arg7[%c0_15, %c0_16, %c0_17], %32 {strides = array<i32>} : memref<1x8x64xbf16, #tpu.memory_space<vmem>>, vector<1x8x64xbf16>,
    return
  }
  func.func @transform_0(%arg0: i32, %arg1: i32) -> (i32, i32, i32) {
    %c0_i32 = arith.constant 0 : i32
    %c0_i32_0 = arith.constant 0 : i32
    return %arg0, %arg1, %c0_i32 : i32, i32, i32
  }
  func.func @transform_1(%arg0: i32, %arg1: i32) -> (i32, i32) {
    %c0_i32 = arith.constant 0 : i32
    %c0_i32_0 = arith.constant 0 : i32
    %c0_i32_1 = arith.constant 0 : i32
    return %c0_i32, %c0_i32_0 : i32, i32
  }
  func.func @transform_2(%arg0: i32, %arg1: i32) -> (i32, i32) {
    %c0_i32 = arith.constant 0 : i32
    %c0_i32_0 = arith.constant 0 : i32
    %c0_i32_1 = arith.constant 0 : i32
    return %c0_i32, %c0_i32_0 : i32, i32
  }
  func.func @transform_3(%arg0: i32, %arg1: i32) -> (i32, i32) {
    %c0_i32 = arith.constant 0 : i32
    %c0_i32_0 = arith.constant 0 : i32
    %c0_i32_1 = arith.constant 0 : i32
    return %c0_i32, %c0_i32_0 : i32, i32
  }
  func.func @transform_4(%arg0: i32, %arg1: i32) -> (i32, i32) {
    %c0_i32 = arith.constant 0 : i32
    %c0_i32_0 = arith.constant 0 : i32
    %c0_i32_1 = arith.constant 0 : i32
    return %c0_i32, %c0_i32_0 : i32, i32
  }
  func.func @transform_5(%arg0: i32, %arg1: i32) -> (i32, i32, i32) {
    %c0_i32 = arith.constant 0 : i32
    %c0_i32_0 = arith.constant 0 : i32
    return %arg0, %c0_i32, %arg1 : i32, i32, i32
  }
}

</mosaic_0001>

<llo_original>
// kernel: tpu_custom_call.1
$region0: #{tpu_custom_call.1}
  #allocation0 [shape = 'u32[]', space=smem, size = 0x4, offset = 0x4, fixed_abs, tag = 'smem constant byte address 0x4 - core index']
  #allocation1 [shape = 'u32[144,128]{1,0:T(1,128)}', space=vmem, size = 0x12000, scoped, tag = 'internal scratch']
  %s0 = inlined_call_operand.hbm [shape: bf16[2,64,32], index: 0, kind: input, shape index: {}]
  %s1 = inlined_call_operand.hbm [shape: bf16[8,32], index: 1, kind: input, shape index: {}]
  %s2 = inlined_call_operand.hbm [shape: f32[8,1], index: 2, kind: input, shape index: {}]
  %s3 = inlined_call_operand.hbm [shape: f32[8,1], index: 3, kind: input, shape index: {}]
  %s4 = inlined_call_operand.hbm [shape: f32[8,1], index: 4, kind: input, shape index: {}]
  %s5 = inlined_call_operand.hbm [shape: bf16[2,8,64], index: 5, kind: output, shape index: {}]
  %s6 = sld [smem:[#allocation0]]
  $region73: #{tpu_custom_call.1} parent=0
    _
  %s8 = ssub.s32 1, %s6
  %s9 = scalar_select 0, %s8, %s6
  $region1: #{tpu_custom_call.1} parent=0
    #allocation2 [shape = 'u8[32768]{0}', space=vmem, size = 0x8000, scoped, tag = 'input window, operand 0']
    #allocation3 [shape = 's32[2]{0}', space=sflag, size = 0x8, scoped, tag = 'scoped memory for tpu_custom_call.1']
    #allocation4 [shape = 's32[2]{0}', space=sflag, size = 0x8, scoped, tag = 'scoped memory for tpu_custom_call.1']
    #allocation5 [shape = 'u8[2048]{0}', space=vmem, size = 0x800, scoped, tag = 'input window, operand 1, single buffered']
    #allocation6 [shape = 's32[1]{0}', space=sflag, size = 0x4, scoped, tag = 'scoped memory for tpu_custom_call.1']
    #allocation7 [shape = 'u8[4096]{0}', space=vmem, size = 0x1000, scoped, tag = 'input window, operand 2, single buffered']
    #allocation8 [shape = 'u8[4096]{0}', space=vmem, size = 0x1000, scoped, tag = 'input window, operand 3, single buffered']
    #allocation9 [shape = 's32[1]{0}', space=sflag, size = 0x4, scoped, tag = 'scoped memory for tpu_custom_call.1']
    #allocation10 [shape = 'u8[4096]{0}', space=vmem, size = 0x1000, scoped, tag = 'input window, operand 4, single buffered']
    #allocation11 [shape = 'u8[4096]{0}', space=vmem, size = 0x1000, scoped, tag = 'output window, operand 0']
    %10 = vsyncpa [#allocation3], 0
    %s11 = scalar_lea.sflag [#allocation3], 1
    %12 = vsyncpa %s11, 0
    %13 = vsyncpa [#allocation6], 0
    %14 = vsyncpa [#allocation9], 0
    %15 = vsyncpa [#allocation4], 0
    %s16 = scalar_lea.sflag [#allocation4], 1
    %17 = vsyncpa %s16, 0
    loop: start=0, step=1, limit=4
    $region2: #{tpu_custom_call.1} parent=1 // loop_pre_header
      _
    $region3: #{tpu_custom_call.1} parent=1 // loop_header
      %s19 = sphi 0, %s23
      %p20 = scmp.ge.s32.totalorder %s19, 4
      %s26 = sphi 0, %s38
      %s27 = sphi 0, %s34
      %s28 = sphi 0, %s26
      %s29 = sphi 0, %s27
      %s30 = sphi 0, %s28
      %s31 = sphi 0, %s29
      %s43 = sphi 0, %s45
      %s46 = sphi 0, %s43
      %s47 = sphi 0, %s46
      %s63 = sphi 0, %s47
      %s67 = sphi 0, %s67
      %s69 = sphi 0, %s67
      %s70 = sphi 0, %s69
      %s84 = sphi 0, %s70
      %s88 = sphi 0, %s88
      %s90 = sphi 0, %s88
      %s91 = sphi 0, %s90
      %s105 = sphi 0, %s91
      %s109 = sphi 0, %s109
      %s111 = sphi 0, %s109
      %s112 = sphi 0, %s111
      %s126 = sphi 0, %s112
      %s130 = sphi 0, %s130
      %s132 = sphi 0, %s130
      %s133 = sphi 0, %s132
      %s147 = sphi 0, %s133
      %s155 = sphi 0, %s157
      %s158 = sphi 0, %s155
      %s159 = sphi 0, %s158
      %s175 = sphi 0, %s159
    $region4: #{tpu_custom_call.1} parent=1 // loop_header_branch
      %22 = sbr.rel (%p20) target = $region8
    $region5: #{tpu_custom_call.1} parent=1 // loop_body
      %s24 = ssub.s32 %s19, 1
      %s25 = ssub.s32 %s19, 2
      %s32 = sadd.s32 1, %s27
      %p33 = scmp.ge.s32.totalorder %s32, 1
      %s34 = scalar_select %p33, 0, %s32
      %s35 = sadd.s32 1, %s26
      %s36 = scalar_select %p33, %s35, %s26
      %p37 = scmp.ge.s32.totalorder %s36, 2
      %s38 = scalar_select %p37, 0, %s36
      %s39 = ssub.s32 %s26, %s38
      %s40 = ssub.s32 %s27, %s34
      %s41 = sor.u32 %s39, %s40
      %p42 = scmp.eq.s32.totalorder %s41, 0
      %s44 = sadd.s32 %s43, 1
      %s45 = scalar_select %p42, %s43, %s44
      %p48 = pneg %p42
      %p49 = scmp.eq.s32.totalorder %s19, 1
      %p50 = por %p48, %p49
      %p51 = scmp.ne.s32.totalorder %s43, %s46
      %p52 = scmp.eq.s32.totalorder %s19, 0
      %p53 = por %p51, %p52
      %p54 = scmp.ne.s32.totalorder %s43, %s46
      %p55 = scmp.eq.s32.totalorder %s24, 1
      %p56 = por %p54, %p55
      %p57 = scmp.ne.s32.totalorder %s46, %s47
      %p58 = scmp.eq.s32.totalorder %s24, 0
      %p59 = por %p57, %p58
      %p60 = scmp.ne.s32.totalorder %s46, %s47
      %p61 = scmp.eq.s32.totalorder %s25, 1
      %p62 = por %p60, %p61
      %p64 = scmp.ne.s32.totalorder %s47, %s63
      %p65 = scmp.eq.s32.totalorder %s25, 0
      %p66 = por %p64, %p65
      %s68 = sadd.s32 %s67, 1
      %p71 = scmp.eq.s32.totalorder %s19, 1
      %p72 = scmp.ne.s32.totalorder %s67, %s69
      %p73 = scmp.eq.s32.totalorder %s19, 0
      %p74 = por %p72, %p73
      %p75 = scmp.ne.s32.totalorder %s67, %s69
      %p76 = scmp.eq.s32.totalorder %s24, 1
      %p77 = por %p75, %p76
      %p78 = scmp.ne.s32.totalorder %s69, %s70
      %p79 = scmp.eq.s32.totalorder %s24, 0
      %p80 = por %p78, %p79
      %p81 = scmp.ne.s32.totalorder %s69, %s70
      %p82 = scmp.eq.s32.totalorder %s25, 1
      %p83 = por %p81, %p82
      %p85 = scmp.ne.s32.totalorder %s70, %s84
      %p86 = scmp.eq.s32.totalorder %s25, 0
      %p87 = por %p85, %p86
      %s89 = sadd.s32 %s88, 1
      %p92 = scmp.eq.s32.totalorder %s19, 1
      %p93 = scmp.ne.s32.totalorder %s88, %s90
      %p94 = scmp.eq.s32.totalorder %s19, 0
      %p95 = por %p93, %p94
      %p96 = scmp.ne.s32.totalorder %s88, %s90
      %p97 = scmp.eq.s32.totalorder %s24, 1
      %p98 = por %p96, %p97
      %p99 = scmp.ne.s32.totalorder %s90, %s91
      %p100 = scmp.eq.s32.totalorder %s24, 0
      %p101 = por %p99, %p100
      %p102 = scmp.ne.s32.totalorder %s90, %s91
      %p103 = scmp.eq.s32.totalorder %s25, 1
      %p104 = por %p102, %p103
      %p106 = scmp.ne.s32.totalorder %s91, %s105
      %p107 = scmp.eq.s32.totalorder %s25, 0
      %p108 = por %p106, %p107
      %s110 = sadd.s32 %s109, 1
      %p113 = scmp.eq.s32.totalorder %s19, 1
      %p114 = scmp.ne.s32.totalorder %s109, %s111
      %p115 = scmp.eq.s32.totalorder %s19, 0
      %p116 = por %p114, %p115
      %p117 = scmp.ne.s32.totalorder %s109, %s111
      %p118 = scmp.eq.s32.totalorder %s24, 1
      %p119 = por %p117, %p118
      %p120 = scmp.ne.s32.totalorder %s111, %s112
      %p121 = scmp.eq.s32.totalorder %s24, 0
      %p122 = por %p120, %p121
      %p123 = scmp.ne.s32.totalorder %s111, %s112
      %p124 = scmp.eq.s32.totalorder %s25, 1
      %p125 = por %p123, %p124
      %p127 = scmp.ne.s32.totalorder %s112, %s126
      %p128 = scmp.eq.s32.totalorder %s25, 0
      %p129 = por %p127, %p128
      %s131 = sadd.s32 %s130, 1
      %p134 = scmp.eq.s32.totalorder %s19, 1
      %p135 = scmp.ne.s32.totalorder %s130, %s132
      %p136 = scmp.eq.s32.totalorder %s19, 0
      %p137 = por %p135, %p136
      %p138 = scmp.ne.s32.totalorder %s130, %s132
      %p139 = scmp.eq.s32.totalorder %s24, 1
      %p140 = por %p138, %p139
      %p141 = scmp.ne.s32.totalorder %s132, %s133
      %p142 = scmp.eq.s32.totalorder %s24, 0
      %p143 = por %p141, %p142
      %p144 = scmp.ne.s32.totalorder %s132, %s133
      %p145 = scmp.eq.s32.totalorder %s25, 1
      %p146 = por %p144, %p145
      %p148 = scmp.ne.s32.totalorder %s133, %s147
      %p149 = scmp.eq.s32.totalorder %s25, 0
      %p150 = por %p148, %p149
      %s151 = ssub.s32 %s26, %s38
      %s152 = ssub.s32 %s27, %s34
      %s153 = sor.u32 %s151, %s152
      %p154 = scmp.eq.s32.totalorder %s153, 0
      %s156 = sadd.s32 %s155, 1
      %s157 = scalar_select %p154, %s155, %s156
      %p160 = pneg %p154
      %p161 = scmp.eq.s32.totalorder %s19, 1
      %p162 = por %p160, %p161
      %p163 = scmp.ne.s32.totalorder %s155, %s158
      %p164 = scmp.eq.s32.totalorder %s19, 0
      %p165 = por %p163, %p164
      %p166 = scmp.ne.s32.totalorder %s155, %s158
      %p167 = scmp.eq.s32.totalorder %s24, 1
      %p168 = por %p166, %p167
      %p169 = scmp.ne.s32.totalorder %s158, %s159
      %p170 = scmp.eq.s32.totalorder %s24, 0
      %p171 = por %p169, %p170
      %p172 = scmp.ne.s32.totalorder %s158, %s159
      %p173 = scmp.eq.s32.totalorder %s25, 1
      %p174 = por %p172, %p173
      %p176 = scmp.ne.s32.totalorder %s159, %s175
      %p177 = scmp.eq.s32.totalorder %s25, 0
      %p178 = por %p176, %p177
      %p179 = scmp.le.s32.totalorder 1, %s19
      %p180 = scmp.lt.s32.totalorder %s19, 3
      %p181 = pnand %p179, %p180
      %p182 = pneg %p181
      // Predicated region
      $region9: #{tpu_custom_call.1} parent=5 // pred_check
        _
      $region10: #{tpu_custom_call.1} parent=5 // pred_check_branch
        %184 = sbr.rel (%p181) target = $region12
      $region11: #{tpu_custom_call.1} parent=5 // pred_region
        %s185 = ssub.s32 %s19, 1
        // Predicated region
        $region13: #{tpu_custom_call.1} parent=11 // pred_check
          %p186 = pneg %p80
        $region14: #{tpu_custom_call.1} parent=11 // pred_check_branch
          %188 = sbr.rel (%p186) target = $region16
        $region15: #{tpu_custom_call.1} parent=11 // pred_region
          %s190 = ssub.s32 64, 64
          %191 = vsyncadd [#allocation6], %s190
          %s193 = sshll.u32 [#allocation5], 4
          %s194 = int_to_ptr.vmem [resolvable:$true] %s193
          %196 = dma.hbm_to_vmem [thread:$0]  %s1, 64, %s194, [#allocation6]
        $region16: #{tpu_custom_call.1} parent=11 // pred_fallthru
          _
        // Predicated region
        $region17: #{tpu_custom_call.1} parent=11 // pred_check
          %p197 = pneg %p101
        $region18: #{tpu_custom_call.1} parent=11 // pred_check_branch
          %199 = sbr.rel (%p197) target = $region20
        $region19: #{tpu_custom_call.1} parent=11 // pred_region
          %s201 = ssub.s32 128, 128
          %202 = vsyncadd [#allocation6], %s201
          %s204 = sshll.u32 [#allocation7], 4
          %s205 = int_to_ptr.vmem [resolvable:$true] %s204
          %207 = dma.hbm_to_vmem [thread:$0]  %s2, 128, %s205, [#allocation6]
        $region20: #{tpu_custom_call.1} parent=11 // pred_fallthru
          _
        // Predicated region
        $region21: #{tpu_custom_call.1} parent=11 // pred_check
          %p208 = pneg %p122
        $region22: #{tpu_custom_call.1} parent=11 // pred_check_branch
          %210 = sbr.rel (%p208) target = $region24
        $region23: #{tpu_custom_call.1} parent=11 // pred_region
          %s212 = ssub.s32 128, 128
          %213 = vsyncadd [#allocation9], %s212
          %s215 = sshll.u32 [#allocation8], 4
          %s216 = int_to_ptr.vmem [resolvable:$true] %s215
          %218 = dma.hbm_to_vmem [thread:$0]  %s3, 128, %s216, [#allocation9]
        $region24: #{tpu_custom_call.1} parent=11 // pred_fallthru
          _
        // Predicated region
        $region25: #{tpu_custom_call.1} parent=11 // pred_check
          %p219 = pneg %p143
        $region26: #{tpu_custom_call.1} parent=11 // pred_check_branch
          %221 = sbr.rel (%p219) target = $region28
        $region27: #{tpu_custom_call.1} parent=11 // pred_region
          %s223 = ssub.s32 128, 128
          %224 = vsyncadd [#allocation9], %s223
          %s226 = sshll.u32 [#allocation10], 4
          %s227 = int_to_ptr.vmem [resolvable:$true] %s226
          %229 = dma.hbm_to_vmem [thread:$0]  %s4, 128, %s227, [#allocation9]
        $region28: #{tpu_custom_call.1} parent=11 // pred_fallthru
          _
      $region12: #{tpu_custom_call.1} parent=5 // pred_fallthru
        _
      %p230 = scmp.lt.s32.totalorder %s19, 2
      // Predicated region
      $region29: #{tpu_custom_call.1} parent=5 // pred_check
        %p231 = pneg %p230
      $region30: #{tpu_custom_call.1} parent=5 // pred_check_branch
        %233 = sbr.rel (%p231) target = $region32
      $region31: #{tpu_custom_call.1} parent=5 // pred_region
        // Predicated region
        $region33: #{tpu_custom_call.1} parent=31 // pred_check
          %p234 = pneg %p53
        $region34: #{tpu_custom_call.1} parent=31 // pred_check_branch
          %236 = sbr.rel (%p234) target = $region36
        $region35: #{tpu_custom_call.1} parent=31 // pred_region
          %s237 = sand.u32 %s43, 1
          %s238 = scalar_lea.sflag [#allocation3], %s237
          %s239 = sand.u32 %s43, 1
          %s240 = smul.addr %s239, 32
          %s241 = scalar_lea.vmem [#allocation2], %s240
          %s242 = smul.u32 8, %s27
          %s244 = ssub.s32 512, 512
          %245 = vsyncadd %s238, %s244
          %s246 = smul.addr %s26, 8
          %s247 = sadd.s32 %s242, %s246
          %s248 = smul.addr %s247, 64
          %s249 = scalar_lea.hbm %s0, %s248
          %s250 = sshll.u32 %s241, 4
          %s251 = int_to_ptr.vmem [resolvable:$true] %s250
          %256 = dma.hbm_to_vmem [thread:$0]  %s249, 512, %s251, %s238, 64, 64, 4
        $region36: #{tpu_custom_call.1} parent=31 // pred_fallthru
          _
      $region32: #{tpu_custom_call.1} parent=5 // pred_fallthru
        _
      %p257 = scmp.le.s32.totalorder 1, %s19
      %p258 = scmp.lt.s32.totalorder %s19, 3
      %p259 = pnand %p257, %p258
      %p260 = pneg %p259
      // Predicated region
      $region37: #{tpu_custom_call.1} parent=5 // pred_check
        _
      $region38: #{tpu_custom_call.1} parent=5 // pred_check_branch
        %262 = sbr.rel (%p259) target = $region40
      $region39: #{tpu_custom_call.1} parent=5 // pred_region
        %s263 = ssub.s32 %s19, 1
        %s264 = sand.u32 %s46, 1
        %s265 = scalar_lea.sflag [#allocation3], %s264
        %s266 = sand.u32 %s46, 1
        %s267 = smul.addr %s266, 32
        %s268 = scalar_lea.vmem [#allocation2], %s267
        // Predicated region
        $region41: #{tpu_custom_call.1} parent=39 // pred_check
          %p269 = pneg %p59
        $region42: #{tpu_custom_call.1} parent=39 // pred_check_branch
          %271 = sbr.rel (%p269) target = $region44
        $region43: #{tpu_custom_call.1} parent=39 // pred_region
          %272 = dma.done %s265, 512
        $region44: #{tpu_custom_call.1} parent=39 // pred_fallthru
          _
        // Predicated region
        $region45: #{tpu_custom_call.1} parent=39 // pred_check
          %p273 = pneg %p80
        $region46: #{tpu_custom_call.1} parent=39 // pred_check_branch
          %275 = sbr.rel (%p273) target = $region48
        $region47: #{tpu_custom_call.1} parent=39 // pred_region
          %276 = dma.done [#allocation6], 64
        $region48: #{tpu_custom_call.1} parent=39 // pred_fallthru
          _
        // Predicated region
        $region49: #{tpu_custom_call.1} parent=39 // pred_check
          %p277 = pneg %p101
        $region50: #{tpu_custom_call.1} parent=39 // pred_check_branch
          %279 = sbr.rel (%p277) target = $region52
        $region51: #{tpu_custom_call.1} parent=39 // pred_region
          %280 = dma.done [#allocation6], 128
        $region52: #{tpu_custom_call.1} parent=39 // pred_fallthru
          _
        // Predicated region
        $region53: #{tpu_custom_call.1} parent=39 // pred_check
          %p281 = pneg %p122
        $region54: #{tpu_custom_call.1} parent=39 // pred_check_branch
          %283 = sbr.rel (%p281) target = $region56
        $region55: #{tpu_custom_call.1} parent=39 // pred_region
          %284 = dma.done [#allocation9], 128
        $region56: #{tpu_custom_call.1} parent=39 // pred_fallthru
          _
        // Predicated region
        $region57: #{tpu_custom_call.1} parent=39 // pred_check
          %p285 = pneg %p143
        $region58: #{tpu_custom_call.1} parent=39 // pred_check_branch
          %287 = sbr.rel (%p285) target = $region60
        $region59: #{tpu_custom_call.1} parent=39 // pred_region
          %288 = dma.done [#allocation9], 128
        $region60: #{tpu_custom_call.1} parent=39 // pred_fallthru
          _
        %s289 = sand.u32 %s46, 1
        %s290 = scalar_lea.sflag [#allocation3], %s289
        %s291 = sand.u32 %s46, 1
        %s292 = smul.addr %s291, 32
        %s293 = scalar_lea.vmem [#allocation2], %s292
        %p294 = pneg %p59
        %p295 = pneg %p56
        %p296 = pneg %p80
        %p297 = pneg %p77
        %p298 = pneg %p101
        %p299 = pneg %p98
        %p300 = pneg %p122
        %p301 = pneg %p119
        %p302 = pneg %p143
        %p303 = pneg %p140
        %p304 = pneg %p171
        %p305 = pneg %p168
        %s306 = sand.u32 %s158, 1
        %s307 = scalar_lea.sflag [#allocation4], %s306
        %s308 = sand.u32 %s158, 1
        %s309 = smul.addr %s308, 4
        %s310 = scalar_lea.vmem [#allocation11], %s309
        %s311 = smul.u32 8, %s29
        %v313 = vld [vmem:[#allocation5] sm:$0xf]
        %v314 = vld [vmem:[%s268] sm:$0xf]
        %v315 = vld [vmem:[%s268 + $0x4] sm:$0xf]
        %v316 = vld [vmem:[%s268 + $0x8] sm:$0xf]
        %v317 = vld [vmem:[%s268 + $0xc] sm:$0xf]
        %v318 = vld [vmem:[%s268 + $0x10] sm:$0xf]
        %v319 = vld [vmem:[%s268 + $0x14] sm:$0xf]
        %v320 = vld [vmem:[%s268 + $0x18] sm:$0xf]
        %v321 = vld [vmem:[%s268 + $0x1c] sm:$0xf]
        %v322 = vld [vmem:[#allocation7] sm:$0xff]
        %324 = vset.pattern.permute.xlu0 0
        %325 = vperm.xlu0 %324, %v322
        %v326 = vpop.permute.xlu0 %325
        %v336 = vunpack.c.l.b16 %v314
        %v337 = vunpack.c.l.b16 %v315
        %v338 = vunpack.c.l.b16 %v316
        %v339 = vunpack.c.l.b16 %v317
        %v340 = vunpack.c.l.b16 %v318
        %v341 = vunpack.c.l.b16 %v319
        %v342 = vunpack.c.l.b16 %v320
        %v343 = vunpack.c.l.b16 %v321
        %v344 = vpack.c.b16 %v337, %v336
        %v345 = vpack.c.b16 %v339, %v338
        %v346 = vpack.c.b16 %v341, %v340
        %v347 = vpack.c.b16 %v343, %v342
        %vm348 = vcmask 261120
        %v350 = vsel %vm348, %v313, 0
        %v353 = vsel %vm348, %v344, 0
        %v356 = vsel %vm348, %v345, 0
        %v359 = vsel %vm348, %v346, 0
        %v362 = vsel %vm348, %v347, 0
        %364 = vmatprep.subr.bf16.mxu0 0
        %365 = vmatpush1.bf16.xpose.msra.mxu0 %v353
        %366 = vmatprep.subr.bf16.mxu0 0
        %367 = vmatpush1.bf16.xpose.msra.mxu0 %v356
        %368 = vmatprep.subr.bf16.mxu0 0
        %369 = vmatpush1.bf16.xpose.msra.mxu0 %v359
        %370 = vmatprep.subr.bf16.mxu0 0
        %371 = vmatpush1.bf16.xpose.msra.mxu0 %v362
        %372 = vmatprep.subr.bf16.mxu0 0
        %373 = vmatpush1.bf16.xpose.msra.mxu0 0
        %374 = vmatprep.subr.bf16.mxu0 0
        %375 = vmatpush1.bf16.xpose.msra.mxu0 0
        %376 = vmatprep.subr.bf16.mxu0 0
        %377 = vmatpush1.bf16.xpose.msra.mxu0 0
        %378 = vmatprep.subr.bf16.mxu0 0
        %379 = vmatpush1.bf16.xpose.msra.mxu0 0
        %380 = vmatprep.subr.bf16.mxu0 0
        %381 = vmatpush1.bf16.xpose.msra.mxu0 0
        %382 = vmatprep.subr.bf16.mxu0 0
        %383 = vmatpush1.bf16.xpose.msra.mxu0 0
        %384 = vmatprep.subr.bf16.mxu0 0
        %385 = vmatpush1.bf16.xpose.msra.mxu0 0
        %386 = vmatprep.subr.bf16.mxu0 0
        %387 = vmatpush1.bf16.xpose.msra.mxu0 0
        %388 = vmatprep.subr.bf16.mxu0 0
        %389 = vmatpush1.bf16.xpose.msra.mxu0 0
        %390 = vmatprep.subr.bf16.mxu0 0
        %391 = vmatpush1.bf16.xpose.msra.mxu0 0
        %392 = vmatprep.subr.bf16.mxu0 0
        %393 = vmatpush1.bf16.xpose.msra.mxu0 0
        %394 = vmatprep.subr.bf16.mxu0 0
        %395 = vmatpush1.bf16.xpose.msra.mxu0 0
        %396 = vmatprep.mubr.bf16.mxu0 0
        %397 = vmatmul.mubr.bf16.gmra.mrb[0].mxu0 %v350
        %v398 = vpop.f32.mrb[0].mxu0
        %v399 = vadd.f32 %v326, %v398
        %v400 = vpop.f32.mrb[0].mxu0
        %v401 = vpop.f32.mrb[0].mxu0
        %v402 = vpop.f32.mrb[0].mxu0
        %403 = vdwg.mxu0
        %vm404 = vcmask 523264
        %v405 = vsel %vm404, %v399, 0.0
        %v406 = vrot.slane %v405, 4
        %v407 = vadd.f32 %v405, %v406
        %v408 = vrot.slane %v407, 2
        %v409 = vadd.f32 %v407, %v408
        %v410 = vrot.slane %v409, 1
        %v411 = vadd.f32 %v409, %v410
        %v412 = vrcp.pop 8.0
        %v413 = vmul.f32 %v411, %v412
        %v414 = vsub.f32 %v399, %v413
        %v415 = vmul.f32 %v414, %v414
        %v416 = vsel %vm404, %v415, 0.0
        %v417 = vrot.slane %v416, 4
        %v418 = vadd.f32 %v416, %v417
        %v419 = vrot.slane %v418, 2
        %v420 = vadd.f32 %v418, %v419
        %v421 = vrot.slane %v420, 1
        %v422 = vadd.f32 %v420, %v421
        %v423 = vmul.f32 %v422, %v412
        %v424 = vadd.f32 %v423, 1e-05
        %v425 = vrsqrt.pop %v424
        %v426 = vmul.f32 %v414, %v425
        %v427 = vld [vmem:[#allocation8] sm:$0xff]
        %429 = vset.pattern.permute.xlu0 0
        %430 = vperm.xlu0 %429, %v427
        %v431 = vpop.permute.xlu0 %430
        %v433 = vmul.f32 %v426, %v431
        %v434 = vld [vmem:[#allocation10] sm:$0xff]
        %436 = vset.pattern.permute.xlu0 0
        %437 = vperm.xlu0 %436, %v434
        %v438 = vpop.permute.xlu0 %437
        %v440 = vadd.f32 %v433, %v438
        %v441 = vpack.c.bf16 %v440, %v440
        %vm442 = vcmask 519168
        %443 = vst.msk [vmem:[%s310] sm:$0xf] %vm442, %v441
        %s444 = sand.u32 %s158, 1
        %s445 = scalar_lea.sflag [#allocation4], %s444
        %s446 = sand.u32 %s158, 1
        %s447 = smul.addr %s446, 4
        %s448 = scalar_lea.vmem [#allocation11], %s447
        // Predicated region
        $region61: #{tpu_custom_call.1} parent=39 // pred_check
          %p449 = pneg %p168
        $region62: #{tpu_custom_call.1} parent=39 // pred_check_branch
          %451 = sbr.rel (%p449) target = $region64
        $region63: #{tpu_custom_call.1} parent=39 // pred_region
          %s453 = ssub.s32 64, 64
          %454 = vsyncadd %s445, %s453
          %s455 = sadd.s32 %s29, %s28
          %s456 = smul.addr %s455, 64
          %s457 = scalar_lea.hbm %s5, %s456
          %s459 = sshll.u32 %s448, 4
          %s460 = int_to_ptr.vmem [resolvable:$true] %s459
          %462 = dma.vmem_to_hbm [thread:$0]  %s460, 64, %s457, %s445
        $region64: #{tpu_custom_call.1} parent=39 // pred_fallthru
          _
      $region40: #{tpu_custom_call.1} parent=5 // pred_fallthru
        _
      %p463 = scmp.le.s32.totalorder 2, %s19
      // Predicated region
      $region65: #{tpu_custom_call.1} parent=5 // pred_check
        %p464 = pneg %p463
      $region66: #{tpu_custom_call.1} parent=5 // pred_check_branch
        %466 = sbr.rel (%p464) target = $region68
      $region67: #{tpu_custom_call.1} parent=5 // pred_region
        %s467 = ssub.s32 %s19, 2
        // Predicated region
        $region69: #{tpu_custom_call.1} parent=67 // pred_check
          %p468 = pneg %p174
        $region70: #{tpu_custom_call.1} parent=67 // pred_check_branch
          %470 = sbr.rel (%p468) target = $region72
        $region71: #{tpu_custom_call.1} parent=67 // pred_region
          %s471 = sand.u32 %s159, 1
          %s472 = scalar_lea.sflag [#allocation4], %s471
          %s473 = sand.u32 %s159, 1
          %s474 = smul.addr %s473, 4
          %s475 = scalar_lea.vmem [#allocation11], %s474
          %476 = dma.done %s472, 64
        $region72: #{tpu_custom_call.1} parent=67 // pred_fallthru
          _
      $region68: #{tpu_custom_call.1} parent=5 // pred_fallthru
        _
    $region6: #{tpu_custom_call.1} parent=1 // loop_footer
      %s23 = sadd.s32 1, %s19
    $region7: #{tpu_custom_call.1} parent=1 // loop_footer_branch
      %18 = sbr.rel target = $region3
    $region8: #{tpu_custom_call.1} parent=1 // loop_exit
      _
    %477 = vsyncpa [#allocation3], 1
    %s478 = scalar_lea.sflag [#allocation3], 1
    %479 = vsyncpa %s478, 1
    %480 = vsyncpa [#allocation6], 1
    %481 = vsyncpa [#allocation9], 1
    %482 = vsyncpa [#allocation4], 1
    %s483 = scalar_lea.sflag [#allocation4], 1
    %484 = vsyncpa %s483, 1

</llo_original>
